<compile_context>
chip_gen: v6e
topology: v6e:2x2x1
jax: 0.10.0
libtpu: 0.0.40
codegen_flags: <defaults>
</compile_context>

<pallas_src>
import functools

import jax
import jax.numpy as jnp
from jax import lax
from jax.experimental import pallas as pl
from jax.experimental.pallas import tpu as pltpu


def _round_up(x, m):
    return (x + m - 1) // m * m


# ---------------------------------------------------------------------------
# Fused kernel: im2col-conv (single MXU dot per cf chunk, K = 9*Cin) + bias
# + ReLU + masked global-average-pool partial sums (MXU matvec) accumulated
# into the resident (8, cf_pad) output block.
# Grid = (batch, spatial_half, spatial_tile).
# ---------------------------------------------------------------------------
def _conv_gap_kernel(x_ref, w_ref, b_ref, out_ref, *,
                     tile_m, cf_chunk, n_cf, n_m, hw):
    h = pl.program_id(1)          # spatial half (parallel; megacore at B==1)
    m = pl.program_id(2)          # spatial tile within the half (reduction)

    @pl.when(m == 0)
    def _init():
        out_ref[...] = jnp.zeros_like(out_ref)

    # One aligned bf16 load of this tile's im2col rows (K = 9*Cin lanes).
    x_tile = x_ref[...]                                        # (tile_m, K)

    # Validity mask built in-kernel (no 1-lane DMA per step).  Valid rows are
    # round-robined across the 8 sublanes so the accumulator update below is
    # an unmasked 8-sublane store; 1/(H*W) scaling happens in the wrapper.
    # NOTE: the mask must zero padded rows AFTER bias+ReLU -- the matvec below
    # does exactly that; do not move the masking earlier.
    row = lax.broadcasted_iota(jnp.int32, (8, tile_m), 0)
    col = lax.broadcasted_iota(jnp.int32, (8, tile_m), 1)
    gidx = (h * n_m + m) * tile_m + col                        # global position
    mask = ((gidx < hw) & ((col & 7) == row)).astype(jnp.float32)  # (8, tile_m)

    # Chunk the feature dim so the live (tile_m, cf_chunk) f32 intermediate
    # stays within the register file / small VMEM temporaries.
    @pl.loop(0, n_cf)
    def _cf(ci):
        c0 = pl.multiple_of(ci * cf_chunk, cf_chunk)
        # Single bf16 MXU dot with in-MXU accumulation over K = 9*Cin.
        acc = jnp.dot(x_tile, w_ref[:, pl.ds(c0, cf_chunk)],
                      preferred_element_type=jnp.float32)      # (tile_m, cfc)
        feat = jnp.maximum(acc + b_ref[:, pl.ds(c0, cf_chunk)], 0.0)
        # Masked GAP partial sum as an MXU matvec (mask applied after ReLU).
        out_ref[:, pl.ds(c0, cf_chunk)] += jnp.dot(
            mask, feat, preferred_element_type=jnp.float32)


# ---------------------------------------------------------------------------
# Public wrapper: PyTorch-layout tensors in, (B, numclasses) logits out.
# ---------------------------------------------------------------------------
@functools.partial(jax.jit, static_argnames=("tile_m",))
def classification_forward(images_nchw, conv_w, conv_b, fc_w, fc_b, *,
                           tile_m=256):
    """images_nchw: (B, Cin, H, W) f32;  conv_w: (Cfeat, Cin, 3, 3);
    conv_b: (Cfeat,);  fc_w: (numclasses, Cfeat);  fc_b: (numclasses,)."""
    B, Cin, H, W = images_nchw.shape
    Cfeat = conv_w.shape[0]
    K = 9 * Cin
    HW = H * W

    cf_chunk = 128
    cf_pad = _round_up(Cfeat, cf_chunk)          # lane-dense feature dim
    n_cf = cf_pad // cf_chunk

    # Spatial tiling: tile_m sweepable (256/512/1024), clamped for tiny images.
    tile_m = _round_up(min(tile_m, _round_up(HW, 8)), 8)
    n_m_total = pl.cdiv(HW, tile_m)
    n_split = 2 if n_m_total >= 2 else 1         # 2-way parallel split (v7x)
    n_m = pl.cdiv(n_m_total, n_split)
    s_pad = n_split * n_m * tile_m

    # --- wrapper-side im2col: 9 shifted views concatenated along channels ---
    x = jnp.transpose(images_nchw, (0, 2, 3, 1)).astype(jnp.float32)   # NHWC
    xp = jnp.pad(x, ((0, 0), (1, 1), (1, 1), (0, 0)))
    taps = [xp[:, dh:dh + H, dw:dw + W, :] for dh in range(3) for dw in range(3)]
    xcol = jnp.concatenate(taps, axis=-1).reshape(B, HW, K)
    xcol = jnp.pad(xcol, ((0, 0), (0, s_pad - HW), (0, 0))).astype(jnp.bfloat16)

    # Conv weight (Cfeat, Cin, 3, 3) -> (9*Cin, cf_pad) bf16, tap-major rows
    # matching the im2col channel order; bias f32.
    w = jnp.transpose(conv_w, (2, 3, 1, 0)).reshape(K, Cfeat)
    w = jnp.pad(w, ((0, 0), (0, cf_pad - Cfeat))).astype(jnp.bfloat16)
    cb = jnp.pad(conv_b, (0, cf_pad - Cfeat)).reshape(1, cf_pad).astype(jnp.float32)

    kernel = functools.partial(_conv_gap_kernel, tile_m=tile_m,
                               cf_chunk=cf_chunk, n_cf=n_cf, n_m=n_m, hw=HW)

    pooled_sum = pl.pallas_call(
        kernel,
        out_shape=jax.ShapeDtypeStruct((B, n_split, 8, cf_pad), jnp.float32),
        grid=(B, n_split, n_m),
        in_specs=[
            pl.BlockSpec((None, tile_m, K), lambda b, h, m: (b, h * n_m + m, 0)),
            pl.BlockSpec((K, cf_pad), lambda b, h, m: (0, 0)),
            pl.BlockSpec((1, cf_pad), lambda b, h, m: (0, 0)),
        ],
        out_specs=pl.BlockSpec((None, None, 8, cf_pad),
                               lambda b, h, m: (b, h, 0, 0)),
        compiler_params=pltpu.CompilerParams(
            dimension_semantics=("parallel", "parallel", "arbitrary"),
            vmem_limit_bytes=32 * 1024 * 1024),
    )(xcol, w, cb)

    # GAP finalize (tiny) + FC head hoisted out of the kernel (tiny XLA GEMM;
    # keeps the f32 FC weight out of VMEM on v7x and off the v5e store slot).
    pooled = pooled_sum.sum(axis=(1, 2))[:, :Cfeat] * (1.0 / HW)   # (B, Cfeat)
    return pooled @ fc_w.T.astype(jnp.float32) + fc_b.astype(jnp.float32)


# ---------------------------------------------------------------------------
# Pure-JAX f32 reference for correctness checking.
# ---------------------------------------------------------------------------
def _reference_forward(images_nchw, conv_w, conv_b, fc_w, fc_b):
    B, Cin, H, W = images_nchw.shape
    Cfeat = conv_w.shape[0]
    x = jnp.transpose(images_nchw, (0, 2, 3, 1)).astype(jnp.float32)
    xp = jnp.pad(x, ((0, 0), (1, 1), (1, 1), (0, 0)))
    y = jnp.zeros((B, H, W, Cfeat), jnp.float32)
    for dh in range(3):
        for dw in range(3):
            y = y + jnp.einsum("bhwc,fc->bhwf",
                               xp[:, dh:dh + H, dw:dw + W, :],
                               conv_w[:, :, dh, dw])
    feat = jnp.maximum(y + conv_b, 0.0)
    pooled = feat.mean(axis=(1, 2))
    return pooled @ fc_w.T + fc_b


if __name__ == "__main__":
    B, Cin, H, W = 2, 4, 16, 16     # small image-like input
    Cfeat = 32                      # stand-in for encoder.fc.in_features
    numclasses = 10

    key = jax.random.PRNGKey(0)
    k_img, k_cw, k_cb, k_fw, k_fb = jax.random.split(key, 5)

    images = jax.random.normal(k_img, (B, Cin, H, W), dtype=jnp.float32)
    conv_w = jax.random.normal(k_cw, (Cfeat, Cin, 3, 3), dtype=jnp.float32) * 0.1
    conv_b = jax.random.normal(k_cb, (Cfeat,), dtype=jnp.float32) * 0.1
    fc_w = jax.random.normal(k_fw, (numclasses, Cfeat), dtype=jnp.float32) * 0.1
    fc_b = jax.random.normal(k_fb, (numclasses,), dtype=jnp.float32) * 0.1

    logits = classification_forward(images, conv_w, conv_b, fc_w, fc_b)
    logits = jax.block_until_ready(logits)

    ref = _reference_forward(images, conv_w, conv_b, fc_w, fc_b)
    assert logits.shape == (B, numclasses)
    err = float(jnp.max(jnp.abs(logits - ref)))
    # bf16 MXU inputs with f32 accumulation -> tolerance reflects bf16 rounding.
    assert err < 2e-2, f"mismatch vs reference: max abs err {err}"

    print("KERNEL_OK")
</pallas_src>

<mosaic_0001>
module attributes {stable_mosaic.version = 11 : i64} {
  func.func @_conv_gap_kernel(%arg0: i32, %arg1: i32, %arg2: i32, %arg3: memref<1x256x36xbf16, #tpu.memory_space<vmem>>, %arg4: memref<36x128xbf16, #tpu.memory_space<vmem>>, %arg5: memref<1x128xf32, #tpu.memory_space<vmem>>, %arg6: memref<1x1x8x128xf32, #tpu.memory_space<vmem>>) attributes {dimension_semantics = [#tpu.dimension_semantics<parallel>, #tpu.dimension_semantics<parallel>, #tpu.dimension_semantics<arbitrary>], iteration_bounds = array<i64: 2, 1, 1>, scalar_prefetch = 0 : i64, scratch_operands = 0 : i64, tpu.core_type = #tpu.core_type<tc>, window_params = [{transform_indices = @transform_0, window_bounds = array<i64: 1, 256, 36>}, {pipeline_mode = #tpu.pipeline_mode<synchronous>, transform_indices = @transform_1, window_bounds = array<i64: 36, 128>}, {pipeline_mode = #tpu.pipeline_mode<synchronous>, transform_indices = @transform_2, window_bounds = array<i64: 1, 128>}, {transform_indices = @transform_3, window_bounds = array<i64: 1, 1, 8, 128>}]} {
    %c0_i32 = arith.constant 0 : i32
    %0 = arith.cmpi eq, %arg2, %c0_i32 : i32
    %1 = arith.extui %0 : i1 to i32
    %c0_i32_0 = arith.constant 0 : i32
    %2 = arith.cmpi ne, %1, %c0_i32_0 : i32
    scf.if %2 {
      %cst_18 = arith.constant 0.000000e+00 : f32
      %42 = vector.broadcast %cst_18 : f32 to vector<8x128xf32>
      %c0_19 = arith.constant 0 : index
      %c0_20 = arith.constant 0 : index
      %c0_21 = arith.constant 0 : index
      %c0_22 = arith.constant 0 : index
      %43 = vector.load %arg6[%c0_19, %c0_20, %c0_21, %c0_22] : memref<1x1x8x128xf32, #tpu.memory_space<vmem>>, vector<1x1x8x128xf32>
      %44 = vector.shape_cast %43 : vector<1x1x8x128xf32> to vector<8x128xf32>
      %45 = vector.shape_cast %42 : vector<8x128xf32> to vector<1x1x8x128xf32>
      tpu.vector_store %arg6[%c0_19, %c0_20, %c0_21, %c0_22], %45 {strides = array<i32>} : memref<1x1x8x128xf32, #tpu.memory_space<vmem>>, vector<1x1x8x128xf32>,
    } else {
    }
    %c0 = arith.constant 0 : index
    %c0_1 = arith.constant 0 : index
    %c0_2 = arith.constant 0 : index
    %3 = vector.load %arg3[%c0, %c0_1, %c0_2] : memref<1x256x36xbf16, #tpu.memory_space<vmem>>, vector<1x256x36xbf16>
    %4 = vector.shape_cast %3 : vector<1x256x36xbf16> to vector<256x36xbf16>
    %5 = tpu.iota {dimensions = array<i32: 0>} : vector<8x256xi32>
    %6 = tpu.iota {dimensions = array<i32: 1>} : vector<8x256xi32>
    %c1_i32 = arith.constant 1 : i32
    %7 = arith.muli %arg1, %c1_i32 : i32
    %8 = arith.addi %7, %arg2 : i32
    %c256_i32 = arith.constant 256 : i32
    %9 = arith.muli %8, %c256_i32 : i32
    %10 = vector.broadcast %9 : i32 to vector<8x256xi32>
    %11 = arith.addi %10, %6 : vector<8x256xi32>
    %c256_i32_3 = arith.constant 256 : i32
    %12 = vector.broadcast %c256_i32_3 : i32 to vector<8x256xi32>
    %13 = arith.cmpi slt, %11, %12 : vector<8x256xi32>
    %c7_i32 = arith.constant 7 : i32
    %14 = vector.broadcast %c7_i32 : i32 to vector<8x256xi32>
    %15 = arith.andi %6, %14 : vector<8x256xi32>
    %16 = arith.cmpi eq, %15, %5 : vector<8x256xi32>
    %17 = arith.andi %13, %16 : vector<8x256xi1>
    %18 = arith.extui %17 : vector<8x256xi1> to vector<8x256xi32>
    %19 = arith.sitofp %18 : vector<8x256xi32> to vector<8x256xf32>
    %c0_i32_4 = arith.constant 0 : i32
    %c1_i32_5 = arith.constant 1 : i32
    %20 = arith.muli %c0_i32_4, %c1_i32_5 : i32
    %c0_i32_6 = arith.constant 0 : i32
    %21 = arith.addi %c0_i32_6, %20 : i32
    %c128_i32 = arith.constant 128 : i32
    %22 = arith.muli %21, %c128_i32 : i32
    %23 = tpu.assume_multiple %22, 128 : i32
    %c0_7 = arith.constant 0 : index
    %24 = arith.index_cast %23 : i32 to index
    %25 = vector.load %arg4[%c0_7, %24] : memref<36x128xbf16, #tpu.memory_space<vmem>>, vector<36x128xbf16>
    %cst = arith.constant dense<0.000000e+00> : vector<256x128xf32>
    %26 = tpu.matmul %4, %25, %cst {dimension_numbers = #tpu.dot_dimension_numbers<[1], [0], [0], [1], [0, 0, 1, 1], [], []>} : vector<256x36xbf16>, vector<36x128xbf16>, vector<256x128xf32> -> vector<256x128xf32>
    %c0_8 = arith.constant 0 : index
    %27 = arith.index_cast %23 : i32 to index
    %28 = vector.load %arg5[%c0_8, %27] : memref<1x128xf32, #tpu.memory_space<vmem>>, vector<1x128xf32>
    %29 = vector.broadcast %28 : vector<1x128xf32> to vector<256x128xf32>
    %30 = arith.addf %26, %29 : vector<256x128xf32>
    %cst_9 = arith.constant 0.000000e+00 : f32
    %31 = vector.broadcast %cst_9 : f32 to vector<256x128xf32>
    %32 = arith.maximumf %30, %31 : vector<256x128xf32>
    %c0_10 = arith.constant 0 : index
    %c0_11 = arith.constant 0 : index
    %c0_12 = arith.constant 0 : index
    %33 = arith.index_cast %23 : i32 to index
    %34 = vector.load %arg6[%c0_10, %c0_11, %c0_12, %33] : memref<1x1x8x128xf32, #tpu.memory_space<vmem>>, vector<1x1x8x128xf32>
    %35 = vector.shape_cast %34 : vector<1x1x8x128xf32> to vector<8x128xf32>
    %cst_13 = arith.constant dense<0.000000e+00> : vector<8x128xf32>
    %36 = tpu.matmul %19, %32, %cst_13 {dimension_numbers = #tpu.dot_dimension_numbers<[1], [0], [0], [1], [0, 0, 1, 1], [], []>} : vector<8x256xf32>, vector<256x128xf32>, vector<8x128xf32> -> vector<8x128xf32>
    %37 = arith.addf %35, %36 : vector<8x128xf32>
    %c0_14 = arith.constant 0 : index
    %c0_15 = arith.constant 0 : index
    %c0_16 = arith.constant 0 : index
    %38 = arith.index_cast %23 : i32 to index
    %39 = vector.load %arg6[%c0_14, %c0_15, %c0_16, %38] : memref<1x1x8x128xf32, #tpu.memory_space<vmem>>, vector<1x1x8x128xf32>
    %40 = vector.shape_cast %39 : vector<1x1x8x128xf32> to vector<8x128xf32>
    %41 = vector.shape_cast %37 : vector<8x128xf32> to vector<1x1x8x128xf32>
    tpu.vector_store %arg6[%c0_14, %c0_15, %c0_16, %38], %41 {strides = array<i32>} : memref<1x1x8x128xf32, #tpu.memory_space<vmem>>, vector<1x1x8x128xf32>,
    %c1_i32_17 = arith.constant 1 : i32
    return
  }
  func.func @transform_0(%arg0: i32, %arg1: i32, %arg2: i32) -> (i32, i32, i32) {
    %c1_i32 = arith.constant 1 : i32
    %0 = arith.muli %arg1, %c1_i32 : i32
    %1 = arith.addi %0, %arg2 : i32
    %c0_i32 = arith.constant 0 : i32
    %c0_i32_0 = arith.constant 0 : i32
    return %arg0, %1, %c0_i32 : i32, i32, i32
  }
  func.func @transform_1(%arg0: i32, %arg1: i32, %arg2: i32) -> (i32, i32) {
    %c0_i32 = arith.constant 0 : i32
    %c0_i32_0 = arith.constant 0 : i32
    %c0_i32_1 = arith.constant 0 : i32
    return %c0_i32, %c0_i32_0 : i32, i32
  }
  func.func @transform_2(%arg0: i32, %arg1: i32, %arg2: i32) -> (i32, i32) {
    %c0_i32 = arith.constant 0 : i32
    %c0_i32_0 = arith.constant 0 : i32
    %c0_i32_1 = arith.constant 0 : i32
    return %c0_i32, %c0_i32_0 : i32, i32
  }
  func.func @transform_3(%arg0: i32, %arg1: i32, %arg2: i32) -> (i32, i32, i32, i32) {
    %c0_i32 = arith.constant 0 : i32
    %c0_i32_0 = arith.constant 0 : i32
    %c0_i32_1 = arith.constant 0 : i32
    return %arg0, %arg1, %c0_i32, %c0_i32_0 : i32, i32, i32, i32
  }
}

</mosaic_0001>

<llo_original>
// kernel: classification_forward.1
$region0: #{classification_forward.1}
  #allocation0 [shape = 'u32[]', space=smem, size = 0x4, offset = 0x4, fixed_abs, tag = 'smem constant byte address 0x4 - core index']
  #allocation1 [shape = 'u32[144,128]{1,0:T(1,128)}', space=vmem, size = 0x12000, scoped, tag = 'internal scratch']
  %s0 = inlined_call_operand.vmem [shape: bf16[2,256,36], index: 0, kind: input, shape index: {}]
  %s1 = inlined_call_operand.vmem [shape: bf16[36,128], index: 1, kind: input, shape index: {}]
  %s2 = inlined_call_operand.vmem [shape: f32[1,128], index: 2, kind: input, shape index: {}]
  %s3 = inlined_call_operand.vmem [shape: f32[2,1,8,128], index: 3, kind: output, shape index: {}]
  %s4 = sld [smem:[#allocation0]]
  $region49: #{classification_forward.1} parent=0
    _
  %s6 = ssub.s32 1, %s4
  %s7 = scalar_select 0, %s6, %s4
  loop: start=0, step=1, limit=4
  $region2: #{classification_forward.1} parent=0 // loop_pre_header
    _
  $region3: #{classification_forward.1} parent=0 // loop_header
    %s9 = sphi 0, %s13
    %p10 = scmp.ge.s32.totalorder %s9, 4
    %s16 = sphi 0, %s35
    %s17 = sphi 0, %s31
    %s18 = sphi 0, %s27
    %s19 = sphi 0, %s16
    %s20 = sphi 0, %s17
    %s21 = sphi 0, %s18
    %s22 = sphi 0, %s19
    %s23 = sphi 0, %s20
    %s24 = sphi 0, %s21
    %s42 = sphi 0, %s44
    %s45 = sphi 0, %s42
    %s46 = sphi 0, %s45
    %s62 = sphi 0, %s46
    %s66 = sphi 0, %s66
    %s68 = sphi 0, %s66
    %s69 = sphi 0, %s68
    %s83 = sphi 0, %s69
    %s87 = sphi 0, %s87
    %s89 = sphi 0, %s87
    %s90 = sphi 0, %s89
    %s104 = sphi 0, %s90
    %s112 = sphi 0, %s114
    %s115 = sphi 0, %s112
    %s116 = sphi 0, %s115
    %s132 = sphi 0, %s116
  $region4: #{classification_forward.1} parent=0 // loop_header_branch
    %12 = sbr.rel (%p10) target = $region8
  $region5: #{classification_forward.1} parent=0 // loop_body
    %s14 = ssub.s32 %s9, 1
    %s15 = ssub.s32 %s9, 2
    %s25 = sadd.s32 1, %s18
    %p26 = scmp.ge.s32.totalorder %s25, 1
    %s27 = scalar_select %p26, 0, %s25
    %s28 = sadd.s32 1, %s17
    %s29 = scalar_select %p26, %s28, %s17
    %p30 = scmp.ge.s32.totalorder %s29, 1
    %s31 = scalar_select %p30, 0, %s29
    %s32 = sadd.s32 1, %s16
    %s33 = scalar_select %p30, %s32, %s16
    %p34 = scmp.ge.s32.totalorder %s33, 2
    %s35 = scalar_select %p34, 0, %s33
    %s36 = sadd.s32 %s17, %s18
    %s37 = sadd.s32 %s31, %s27
    %s38 = ssub.s32 %s16, %s35
    %s39 = ssub.s32 %s36, %s37
    %s40 = sor.u32 %s38, %s39
    %p41 = scmp.eq.s32.totalorder %s40, 0
    %s43 = sadd.s32 %s42, 1
    %s44 = scalar_select %p41, %s42, %s43
    %p47 = pneg %p41
    %p48 = scmp.eq.s32.totalorder %s9, 1
    %p49 = por %p47, %p48
    %p50 = scmp.ne.s32.totalorder %s42, %s45
    %p51 = scmp.eq.s32.totalorder %s9, 0
    %p52 = por %p50, %p51
    %p53 = scmp.ne.s32.totalorder %s42, %s45
    %p54 = scmp.eq.s32.totalorder %s14, 1
    %p55 = por %p53, %p54
    %p56 = scmp.ne.s32.totalorder %s45, %s46
    %p57 = scmp.eq.s32.totalorder %s14, 0
    %p58 = por %p56, %p57
    %p59 = scmp.ne.s32.totalorder %s45, %s46
    %p60 = scmp.eq.s32.totalorder %s15, 1
    %p61 = por %p59, %p60
    %p63 = scmp.ne.s32.totalorder %s46, %s62
    %p64 = scmp.eq.s32.totalorder %s15, 0
    %p65 = por %p63, %p64
    %s67 = sadd.s32 %s66, 1
    %p70 = scmp.eq.s32.totalorder %s9, 1
    %p71 = scmp.ne.s32.totalorder %s66, %s68
    %p72 = scmp.eq.s32.totalorder %s9, 0
    %p73 = por %p71, %p72
    %p74 = scmp.ne.s32.totalorder %s66, %s68
    %p75 = scmp.eq.s32.totalorder %s14, 1
    %p76 = por %p74, %p75
    %p77 = scmp.ne.s32.totalorder %s68, %s69
    %p78 = scmp.eq.s32.totalorder %s14, 0
    %p79 = por %p77, %p78
    %p80 = scmp.ne.s32.totalorder %s68, %s69
    %p81 = scmp.eq.s32.totalorder %s15, 1
    %p82 = por %p80, %p81
    %p84 = scmp.ne.s32.totalorder %s69, %s83
    %p85 = scmp.eq.s32.totalorder %s15, 0
    %p86 = por %p84, %p85
    %s88 = sadd.s32 %s87, 1
    %p91 = scmp.eq.s32.totalorder %s9, 1
    %p92 = scmp.ne.s32.totalorder %s87, %s89
    %p93 = scmp.eq.s32.totalorder %s9, 0
    %p94 = por %p92, %p93
    %p95 = scmp.ne.s32.totalorder %s87, %s89
    %p96 = scmp.eq.s32.totalorder %s14, 1
    %p97 = por %p95, %p96
    %p98 = scmp.ne.s32.totalorder %s89, %s90
    %p99 = scmp.eq.s32.totalorder %s14, 0
    %p100 = por %p98, %p99
    %p101 = scmp.ne.s32.totalorder %s89, %s90
    %p102 = scmp.eq.s32.totalorder %s15, 1
    %p103 = por %p101, %p102
    %p105 = scmp.ne.s32.totalorder %s90, %s104
    %p106 = scmp.eq.s32.totalorder %s15, 0
    %p107 = por %p105, %p106
    %s108 = ssub.s32 %s16, %s35
    %s109 = ssub.s32 %s17, %s31
    %s110 = sor.u32 %s108, %s109
    %p111 = scmp.eq.s32.totalorder %s110, 0
    %s113 = sadd.s32 %s112, 1
    %s114 = scalar_select %p111, %s112, %s113
    %p117 = pneg %p111
    %p118 = scmp.eq.s32.totalorder %s9, 1
    %p119 = por %p117, %p118
    %p120 = scmp.ne.s32.totalorder %s112, %s115
    %p121 = scmp.eq.s32.totalorder %s9, 0
    %p122 = por %p120, %p121
    %p123 = scmp.ne.s32.totalorder %s112, %s115
    %p124 = scmp.eq.s32.totalorder %s14, 1
    %p125 = por %p123, %p124
    %p126 = scmp.ne.s32.totalorder %s115, %s116
    %p127 = scmp.eq.s32.totalorder %s14, 0
    %p128 = por %p126, %p127
    %p129 = scmp.ne.s32.totalorder %s115, %s116
    %p130 = scmp.eq.s32.totalorder %s15, 1
    %p131 = por %p129, %p130
    %p133 = scmp.ne.s32.totalorder %s116, %s132
    %p134 = scmp.eq.s32.totalorder %s15, 0
    %p135 = por %p133, %p134
    %p136 = scmp.le.s32.totalorder 1, %s9
    %p137 = scmp.lt.s32.totalorder %s9, 3
    %p138 = pnand %p136, %p137
    %p139 = pneg %p138
    // Predicated region
    $region9: #{classification_forward.1} parent=5 // pred_check
      _
    $region10: #{classification_forward.1} parent=5 // pred_check_branch
      %141 = sbr.rel (%p138) target = $region12
    $region11: #{classification_forward.1} parent=5 // pred_region
      %s142 = ssub.s32 %s9, 1
      // Predicated region
      $region13: #{classification_forward.1} parent=11 // pred_check
        %p143 = pneg %p79
      $region14: #{classification_forward.1} parent=11 // pred_check_branch
        %145 = sbr.rel (%p143) target = $region16
      $region15: #{classification_forward.1} parent=11 // pred_region
        _
      $region16: #{classification_forward.1} parent=11 // pred_fallthru
        _
      // Predicated region
      $region17: #{classification_forward.1} parent=11 // pred_check
        %p146 = pneg %p100
      $region18: #{classification_forward.1} parent=11 // pred_check_branch
        %148 = sbr.rel (%p146) target = $region20
      $region19: #{classification_forward.1} parent=11 // pred_region
        _
      $region20: #{classification_forward.1} parent=11 // pred_fallthru
        _
    $region12: #{classification_forward.1} parent=5 // pred_fallthru
      _
    %p149 = scmp.lt.s32.totalorder %s9, 2
    // Predicated region
    $region21: #{classification_forward.1} parent=5 // pred_check
      %p150 = pneg %p149
    $region22: #{classification_forward.1} parent=5 // pred_check_branch
      %152 = sbr.rel (%p150) target = $region24
    $region23: #{classification_forward.1} parent=5 // pred_region
      // Predicated region
      $region25: #{classification_forward.1} parent=23 // pred_check
        %p153 = pneg %p52
      $region26: #{classification_forward.1} parent=23 // pred_check_branch
        %155 = sbr.rel (%p153) target = $region28
      $region27: #{classification_forward.1} parent=23 // pred_region
        %s156 = sadd.s32 %s17, %s18
        %s157 = smul.u32 32, %s156
        %p158 = scmp.lt.s32.totalorder %s16, 1
        %s159 = scalar_select %p158, %s16, 1
        %p160 = scmp.lt.s32.totalorder %s157, 31
        %s161 = scalar_select %p160, %s157, 31
        %s162 = smul.addr %s159, 32
        %s163 = sadd.s32 %s161, %s162
        %s164 = smul.addr %s163, 4
        %s165 = scalar_lea.vmem %s0, %s164
        %s166 = sadd.s32 %s17, %s18
        %s167 = smul.u32 32, %s166
      $region28: #{classification_forward.1} parent=23 // pred_fallthru
        _
    $region24: #{classification_forward.1} parent=5 // pred_fallthru
      _
    %p168 = scmp.le.s32.totalorder 1, %s9
    %p169 = scmp.lt.s32.totalorder %s9, 3
    %p170 = pnand %p168, %p169
    %p171 = pneg %p170
    // Predicated region
    $region29: #{classification_forward.1} parent=5 // pred_check
      _
    $region30: #{classification_forward.1} parent=5 // pred_check_branch
      %173 = sbr.rel (%p170) target = $region32
    $region31: #{classification_forward.1} parent=5 // pred_region
      %s174 = ssub.s32 %s9, 1
      %s175 = sadd.s32 %s20, %s21
      %s176 = smul.u32 32, %s175
      %p177 = scmp.lt.s32.totalorder %s19, 1
      %s178 = scalar_select %p177, %s19, 1
      %p179 = scmp.lt.s32.totalorder %s176, 31
      %s180 = scalar_select %p179, %s176, 31
      %s181 = smul.addr %s178, 32
      %s182 = sadd.s32 %s180, %s181
      %s183 = smul.addr %s182, 4
      %s184 = scalar_lea.vmem %s0, %s183
      %p185 = pneg %p58
      %p186 = pneg %p55
      %p187 = pneg %p79
      %p188 = pneg %p76
      %p189 = pneg %p100
      %p190 = pneg %p97
      %p191 = pneg %p128
      %p192 = pneg %p125
      %p193 = scmp.lt.s32.totalorder %s19, 1
      %s194 = scalar_select %p193, %s19, 1
      %p195 = scmp.lt.s32.totalorder %s20, 0
      %s196 = scalar_select %p195, %s20, 0
      %s197 = sadd.s32 %s196, %s194
      %s198 = smul.addr %s197, 8
      %s199 = scalar_lea.vmem %s3, %s198
      %s200 = sadd.s32 %s20, %s21
      %s201 = smul.u32 32, %s200
      %p202 = scmp.lt.s32.totalorder %s19, 1
      %s203 = scalar_select %p202, %s19, 1
      %p204 = scmp.lt.s32.totalorder %s201, 31
      %s205 = scalar_select %p204, %s201, 31
      %s206 = smul.addr %s203, 32
      %s207 = sadd.s32 %s205, %s206
      %s208 = smul.addr %s207, 4
      %s209 = scalar_lea.vmem %s0, %s208
      %s210 = sadd.s32 %s20, %s21
      %s211 = smul.u32 32, %s210
      %p212 = scmp.lt.s32.totalorder %s19, 1
      %s213 = scalar_select %p212, %s19, 1
      %p214 = scmp.lt.s32.totalorder %s20, 0
      %s215 = scalar_select %p214, %s20, 0
      %s216 = sadd.s32 %s215, %s213
      %s217 = smul.addr %s216, 8
      %s218 = scalar_lea.vmem %s3, %s217
      %p220 = scmp.eq.s32.totalorder %s21, 0
      // Predicated region
      $region33: #{classification_forward.1} parent=31 // pred_check
        %p221 = pneg %p220
      $region34: #{classification_forward.1} parent=31 // pred_check_branch
        %223 = sbr.rel (%p221) target = $region36
      $region35: #{classification_forward.1} parent=31 // pred_region
        %224 = vst [vmem:[%s218] sm:$0xff] 0.0
      $region36: #{classification_forward.1} parent=31 // pred_fallthru
        _
      %v225 = vld [vmem:[%s209] sm:$0xf]
      %v226 = vld [vmem:[%s209 + $0x4] sm:$0xf]
      %v227 = vld [vmem:[%s209 + $0x8] sm:$0xf]
      %v228 = vld [vmem:[%s209 + $0xc] sm:$0xf]
      %v229 = vld [vmem:[%s209 + $0x10] sm:$0xf]
      %v230 = vld [vmem:[%s209 + $0x14] sm:$0xf]
      %v231 = vld [vmem:[%s209 + $0x18] sm:$0xf]
      %v232 = vld [vmem:[%s209 + $0x1c] sm:$0xf]
      %v233 = vld [vmem:[%s209 + $0x20] sm:$0xf]
      %v234 = vld [vmem:[%s209 + $0x24] sm:$0xf]
      %v235 = vld [vmem:[%s209 + $0x28] sm:$0xf]
      %v236 = vld [vmem:[%s209 + $0x2c] sm:$0xf]
      %v237 = vld [vmem:[%s209 + $0x30] sm:$0xf]
      %v238 = vld [vmem:[%s209 + $0x34] sm:$0xf]
      %v239 = vld [vmem:[%s209 + $0x38] sm:$0xf]
      %v240 = vld [vmem:[%s209 + $0x3c] sm:$0xf]
      %v241 = vld [vmem:[%s209 + $0x40] sm:$0xf]
      %v242 = vld [vmem:[%s209 + $0x44] sm:$0xf]
      %v243 = vld [vmem:[%s209 + $0x48] sm:$0xf]
      %v244 = vld [vmem:[%s209 + $0x4c] sm:$0xf]
      %v245 = vld [vmem:[%s209 + $0x50] sm:$0xf]
      %v246 = vld [vmem:[%s209 + $0x54] sm:$0xf]
      %v247 = vld [vmem:[%s209 + $0x58] sm:$0xf]
      %v248 = vld [vmem:[%s209 + $0x5c] sm:$0xf]
      %v249 = vld [vmem:[%s209 + $0x60] sm:$0xf]
      %v250 = vld [vmem:[%s209 + $0x64] sm:$0xf]
      %v251 = vld [vmem:[%s209 + $0x68] sm:$0xf]
      %v252 = vld [vmem:[%s209 + $0x6c] sm:$0xf]
      %v253 = vld [vmem:[%s209 + $0x70] sm:$0xf]
      %v254 = vld [vmem:[%s209 + $0x74] sm:$0xf]
      %v255 = vld [vmem:[%s209 + $0x78] sm:$0xf]
      %v256 = vld [vmem:[%s209 + $0x7c] sm:$0xf]
      %v257 = vlaneseq
      %v258 = vshrl.u32 %v257, 7
      %v259 = vlaneseq
      %v260 = vand.u32 %v259, 127
      %v261 = vadd.s32 %v260, 128
      %s262 = sadd.s32 %s20, %s21
      %s263 = smul.u32 %s262, 256
      %v264 = vstv %s263
      %v265 = vadd.s32 %v264, %v260
      %v266 = vadd.s32 %v264, %v261
      %vm267 = vcmp.lt.s32.totalorder %v265, 256
      %vm268 = vcmp.lt.s32.totalorder %v266, 256
      %v269 = vand.u32 %v260, 7
      %v270 = vand.u32 %v261, 7
      %vm271 = vcmp.eq.s32.totalorder %v269, %v258
      %vm272 = vcmp.eq.s32.totalorder %v270, %v258
      %vm273 = vmand %vm267, %vm271
      %vm274 = vmand %vm268, %vm272
      %v275 = vsel %vm273, 1, 0
      %v276 = vsel %vm274, 1, 0
      %v277 = vcvt.s32.f32 %v275
      %v278 = vcvt.s32.f32 %v276
      %v279 = vld [vmem:[%s1] sm:$0xf]
      %v280 = vld [vmem:[%s1 + $0x4] sm:$0xf]
      %v281 = vld [vmem:[%s1 + $0x8] sm:$0xf]
      %v282 = vld [vmem:[%s1 + $0xc] sm:$0xf]
      %v283 = vld [vmem:[%s1 + $0x10] sm:$0x3]
      %v284 = vld [vmem:[%s2] sm:$0x1]
      %v286 = vlaneseq
      %v287 = vshrl.u32 %v286, 7
      %v288 = vsub.s32 0, %v287
      %v289 = vrot.slane %v284, %v288
      %v323 = vunpack.c.l.b16 %v225
      %v324 = vunpack.c.l.b16 %v226
      %v325 = vunpack.c.l.b16 %v227
      %v326 = vunpack.c.l.b16 %v228
      %v327 = vunpack.c.l.b16 %v229
      %v328 = vunpack.c.l.b16 %v230
      %v329 = vunpack.c.l.b16 %v231
      %v330 = vunpack.c.l.b16 %v232
      %v331 = vunpack.c.l.b16 %v233
      %v332 = vunpack.c.l.b16 %v234
      %v333 = vunpack.c.l.b16 %v235
      %v334 = vunpack.c.l.b16 %v236
      %v335 = vunpack.c.l.b16 %v237
      %v336 = vunpack.c.l.b16 %v238
      %v337 = vunpack.c.l.b16 %v239
      %v338 = vunpack.c.l.b16 %v240
      %v339 = vunpack.c.l.b16 %v241
      %v340 = vunpack.c.l.b16 %v242
      %v341 = vunpack.c.l.b16 %v243
      %v342 = vunpack.c.l.b16 %v244
      %v343 = vunpack.c.l.b16 %v245
      %v344 = vunpack.c.l.b16 %v246
      %v345 = vunpack.c.l.b16 %v247
      %v346 = vunpack.c.l.b16 %v248
      %v347 = vunpack.c.l.b16 %v249
      %v348 = vunpack.c.l.b16 %v250
      %v349 = vunpack.c.l.b16 %v251
      %v350 = vunpack.c.l.b16 %v252
      %v351 = vunpack.c.l.b16 %v253
      %v352 = vunpack.c.l.b16 %v254
      %v353 = vunpack.c.l.b16 %v255
      %v354 = vunpack.c.l.b16 %v256
      %v355 = vpack.c.b16 %v324, %v323
      %v356 = vpack.c.b16 %v326, %v325
      %v357 = vpack.c.b16 %v328, %v327
      %v358 = vpack.c.b16 %v330, %v329
      %v359 = vpack.c.b16 %v332, %v331
      %v360 = vpack.c.b16 %v334, %v333
      %v361 = vpack.c.b16 %v336, %v335
      %v362 = vpack.c.b16 %v338, %v337
      %v363 = vpack.c.b16 %v340, %v339
      %v364 = vpack.c.b16 %v342, %v341
      %v365 = vpack.c.b16 %v344, %v343
      %v366 = vpack.c.b16 %v346, %v345
      %v367 = vpack.c.b16 %v348, %v347
      %v368 = vpack.c.b16 %v350, %v349
      %v369 = vpack.c.b16 %v352, %v351
      %v370 = vpack.c.b16 %v354, %v353
      %v376 = vunpack.c.l.b16 %v279
      %v377 = vunpack.c.l.b16 %v280
      %v378 = vunpack.c.l.b16 %v281
      %v379 = vunpack.c.l.b16 %v282
      %v380 = vunpack.c.l.b16 %v283
      %v381 = vpack.c.b16 %v377, %v376
      %v382 = vpack.c.b16 %v379, %v378
      %v383 = vpack.c.b16 %v380, %v380
      %vm386 = vcmask 293888
      %v388 = vsel %vm386, %v355, 0
      %v391 = vsel %vm386, %v356, 0
      %v394 = vsel %vm386, %v357, 0
      %v397 = vsel %vm386, %v358, 0
      %v400 = vsel %vm386, %v359, 0
      %v403 = vsel %vm386, %v360, 0
      %v406 = vsel %vm386, %v361, 0
      %v409 = vsel %vm386, %v362, 0
      %v412 = vsel %vm386, %v363, 0
      %v415 = vsel %vm386, %v364, 0
      %v418 = vsel %vm386, %v365, 0
      %v421 = vsel %vm386, %v366, 0
      %v424 = vsel %vm386, %v367, 0
      %v427 = vsel %vm386, %v368, 0
      %v430 = vsel %vm386, %v369, 0
      %v433 = vsel %vm386, %v370, 0
      %vm435 = vcmask 1041408
      %v437 = vsel %vm435, %v383, 0
      %439 = vmatprep.subr.bf16.mxu0 0
      %440 = vmatpush1.bf16.msra.mxu0 0
      %441 = vmatprep.subr.bf16.mxu0 0
      %442 = vmatpush1.bf16.msra.mxu0 0
      %443 = vmatprep.subr.bf16.mxu0 0
      %444 = vmatpush1.bf16.msra.mxu0 0
      %445 = vmatprep.subr.bf16.mxu0 0
      %446 = vmatpush1.bf16.msra.mxu0 0
      %447 = vmatprep.subr.bf16.mxu0 0
      %448 = vmatpush1.bf16.msra.mxu0 0
      %449 = vmatprep.subr.bf16.mxu0 0
      %450 = vmatpush1.bf16.msra.mxu0 %v437
      %451 = vmatprep.subr.bf16.mxu0 0
      %452 = vmatpush1.bf16.msra.mxu0 %v382
      %453 = vmatprep.subr.bf16.mxu0 0
      %454 = vmatpush1.bf16.msra.mxu0 %v381
      %455 = vmatprep.subr.bf16.mxu0 0
      %456 = vmatpush2.bf16.msra.mxu0 0
      %457 = vmatprep.subr.bf16.mxu0 0
      %458 = vmatpush2.bf16.msra.mxu0 0
      %459 = vmatprep.subr.bf16.mxu0 0
      %460 = vmatpush2.bf16.msra.mxu0 0
      %461 = vmatprep.subr.bf16.mxu0 0
      %462 = vmatpush2.bf16.msra.mxu0 0
      %463 = vmatprep.subr.bf16.mxu0 0
      %464 = vmatpush2.bf16.msra.mxu0 0
      %465 = vmatprep.subr.bf16.mxu0 0
      %466 = vmatpush2.bf16.msra.mxu0 0
      %467 = vmatprep.subr.bf16.mxu0 0
      %468 = vmatpush2.bf16.msra.mxu0 0
      %469 = vmatprep.subr.bf16.mxu0 0
      %470 = vmatpush2.bf16.msra.mxu0 0
      %471 = vmatprep.mubr.bf16.mxu0 0
      %472 = vmatmul.mubr.bf16.gmra.mxu0 %v388
      %v473 = vpop.f32.mrf.mxu0
      %v474 = vadd.f32 %v289, %v473
      %v475 = vpop.f32.mrf.mxu0
      %v476 = vpop.f32.mrf.mxu0
      %v477 = vadd.f32 %v289, %v476
      %v478 = vpop.f32.mrf.mxu0
      %479 = vmatprep.mubr.bf16.mxu0 0
      %480 = vmatmul.mubr.bf16.gmra.mxu0 %v391
      %v481 = vpop.f32.mrf.mxu0
      %v482 = vadd.f32 %v289, %v481
      %v483 = vpop.f32.mrf.mxu0
      %v484 = vpop.f32.mrf.mxu0
      %v485 = vadd.f32 %v289, %v484
      %v486 = vpop.f32.mrf.mxu0
      %487 = vmatprep.mubr.bf16.mxu0 0
      %488 = vmatmul.mubr.bf16.gmra.mxu0 %v394
      %v489 = vpop.f32.mrf.mxu0
      %v490 = vadd.f32 %v289, %v489
      %v491 = vpop.f32.mrf.mxu0
      %v492 = vpop.f32.mrf.mxu0
      %v493 = vadd.f32 %v289, %v492
      %v494 = vpop.f32.mrf.mxu0
      %495 = vmatprep.mubr.bf16.mxu0 0
      %496 = vmatmul.mubr.bf16.gmra.mxu0 %v397
      %v497 = vpop.f32.mrf.mxu0
      %v498 = vadd.f32 %v289, %v497
      %v499 = vpop.f32.mrf.mxu0
      %v500 = vpop.f32.mrf.mxu0
      %v501 = vadd.f32 %v289, %v500
      %v502 = vpop.f32.mrf.mxu0
      %503 = vmatprep.mubr.bf16.mxu0 0
      %504 = vmatmul.mubr.bf16.gmra.mxu0 %v400
      %v505 = vpop.f32.mrf.mxu0
      %v506 = vadd.f32 %v289, %v505
      %v507 = vpop.f32.mrf.mxu0
      %v508 = vpop.f32.mrf.mxu0
      %v509 = vadd.f32 %v289, %v508
      %v510 = vpop.f32.mrf.mxu0
      %511 = vmatprep.mubr.bf16.mxu0 0
      %512 = vmatmul.mubr.bf16.gmra.mxu0 %v403
      %v513 = vpop.f32.mrf.mxu0
      %v514 = vadd.f32 %v289, %v513
      %v515 = vpop.f32.mrf.mxu0
      %v516 = vpop.f32.mrf.mxu0
      %v517 = vadd.f32 %v289, %v516
      %v518 = vpop.f32.mrf.mxu0
      %519 = vmatprep.mubr.bf16.mxu0 0
      %520 = vmatmul.mubr.bf16.gmra.mxu0 %v406
      %v521 = vpop.f32.mrf.mxu0
      %v522 = vadd.f32 %v289, %v521
      %v523 = vpop.f32.mrf.mxu0
      %v524 = vpop.f32.mrf.mxu0
      %v525 = vadd.f32 %v289, %v524
      %v526 = vpop.f32.mrf.mxu0
      %527 = vmatprep.mubr.bf16.mxu0 0
      %528 = vmatmul.mubr.bf16.gmra.mxu0 %v409
      %v529 = vpop.f32.mrf.mxu0
      %v530 = vadd.f32 %v289, %v529
      %v531 = vpop.f32.mrf.mxu0
      %v532 = vpop.f32.mrf.mxu0
      %v533 = vadd.f32 %v289, %v532
      %v534 = vpop.f32.mrf.mxu0
      %535 = vmatprep.mubr.bf16.mxu0 0
      %536 = vmatmul.mubr.bf16.gmra.mxu0 %v412
      %v537 = vpop.f32.mrf.mxu0
      %v538 = vadd.f32 %v289, %v537
      %v539 = vpop.f32.mrf.mxu0
      %v540 = vpop.f32.mrf.mxu0
      %v541 = vadd.f32 %v289, %v540
      %v542 = vpop.f32.mrf.mxu0
      %543 = vmatprep.mubr.bf16.mxu0 0
      %544 = vmatmul.mubr.bf16.gmra.mxu0 %v415
      %v545 = vpop.f32.mrf.mxu0
      %v546 = vadd.f32 %v289, %v545
      %v547 = vpop.f32.mrf.mxu0
      %v548 = vpop.f32.mrf.mxu0
      %v549 = vadd.f32 %v289, %v548
      %v550 = vpop.f32.mrf.mxu0
      %551 = vmatprep.mubr.bf16.mxu0 0
      %552 = vmatmul.mubr.bf16.gmra.mxu0 %v418
      %v553 = vpop.f32.mrf.mxu0
      %v554 = vadd.f32 %v289, %v553
      %v555 = vpop.f32.mrf.mxu0
      %v556 = vpop.f32.mrf.mxu0
      %v557 = vadd.f32 %v289, %v556
      %v558 = vpop.f32.mrf.mxu0
      %559 = vmatprep.mubr.bf16.mxu0 0
      %560 = vmatmul.mubr.bf16.gmra.mxu0 %v421
      %v561 = vpop.f32.mrf.mxu0
      %v562 = vadd.f32 %v289, %v561
      %v563 = vpop.f32.mrf.mxu0
      %v564 = vpop.f32.mrf.mxu0
      %v565 = vadd.f32 %v289, %v564
      %v566 = vpop.f32.mrf.mxu0
      %567 = vmatprep.mubr.bf16.mxu0 0
      %568 = vmatmul.mubr.bf16.gmra.mxu0 %v424
      %v569 = vpop.f32.mrf.mxu0
      %v570 = vadd.f32 %v289, %v569
      %v571 = vpop.f32.mrf.mxu0
      %v572 = vpop.f32.mrf.mxu0
      %v573 = vadd.f32 %v289, %v572
      %v574 = vpop.f32.mrf.mxu0
      %575 = vmatprep.mubr.bf16.mxu0 0
      %576 = vmatmul.mubr.bf16.gmra.mxu0 %v427
      %v577 = vpop.f32.mrf.mxu0
      %v578 = vadd.f32 %v289, %v577
      %v579 = vpop.f32.mrf.mxu0
      %v580 = vpop.f32.mrf.mxu0
      %v581 = vadd.f32 %v289, %v580
      %v582 = vpop.f32.mrf.mxu0
      %583 = vmatprep.mubr.bf16.mxu0 0
      %584 = vmatmul.mubr.bf16.gmra.mxu0 %v430
      %v585 = vpop.f32.mrf.mxu0
      %v586 = vadd.f32 %v289, %v585
      %v587 = vpop.f32.mrf.mxu0
      %v588 = vpop.f32.mrf.mxu0
      %v589 = vadd.f32 %v289, %v588
      %v590 = vpop.f32.mrf.mxu0
      %591 = vmatprep.mubr.bf16.mxu0 0
      %592 = vmatmul.mubr.bf16.gmra.mxu0 %v433
      %v593 = vpop.f32.mrf.mxu0
      %v594 = vadd.f32 %v289, %v593
      %v595 = vpop.f32.mrf.mxu0
      %v596 = vpop.f32.mrf.mxu0
      %v597 = vadd.f32 %v289, %v596
      %v598 = vpop.f32.mrf.mxu0
      %599 = vdwg.mxu0
      %v600 = vmax.f32 %v474, 0.0
      %v601 = vmax.f32 %v477, 0.0
      %v602 = vmax.f32 %v482, 0.0
      %v603 = vmax.f32 %v485, 0.0
      %v604 = vmax.f32 %v490, 0.0
      %v605 = vmax.f32 %v493, 0.0
      %v606 = vmax.f32 %v498, 0.0
      %v607 = vmax.f32 %v501, 0.0
      %v608 = vmax.f32 %v506, 0.0
      %v609 = vmax.f32 %v509, 0.0
      %v610 = vmax.f32 %v514, 0.0
      %v611 = vmax.f32 %v517, 0.0
      %v612 = vmax.f32 %v522, 0.0
      %v613 = vmax.f32 %v525, 0.0
      %v614 = vmax.f32 %v530, 0.0
      %v615 = vmax.f32 %v533, 0.0
      %v616 = vmax.f32 %v538, 0.0
      %v617 = vmax.f32 %v541, 0.0
      %v618 = vmax.f32 %v546, 0.0
      %v619 = vmax.f32 %v549, 0.0
      %v620 = vmax.f32 %v554, 0.0
      %v621 = vmax.f32 %v557, 0.0
      %v622 = vmax.f32 %v562, 0.0
      %v623 = vmax.f32 %v565, 0.0
      %v624 = vmax.f32 %v570, 0.0
      %v625 = vmax.f32 %v573, 0.0
      %v626 = vmax.f32 %v578, 0.0
      %v627 = vmax.f32 %v581, 0.0
      %v628 = vmax.f32 %v586, 0.0
      %v629 = vmax.f32 %v589, 0.0
      %v630 = vmax.f32 %v594, 0.0
      %v631 = vmax.f32 %v597, 0.0
      %v632 = vld [vmem:[%s218] sm:$0xff]
      %633 = vmatprep.subr.mxu0 0.0
      %634 = vmatpush1.msra.mxu0 %v615
      %635 = vmatprep.subr.mxu0 0.0
      %636 = vmatpush1.msra.mxu0 %v614
      %637 = vmatprep.subr.mxu0 0.0
      %638 = vmatpush1.msra.mxu0 %v613
      %639 = vmatprep.subr.mxu0 0.0
      %640 = vmatpush1.msra.mxu0 %v612
      %641 = vmatprep.subr.mxu0 0.0
      %642 = vmatpush1.msra.mxu0 %v611
      %643 = vmatprep.subr.mxu0 0.0
      %644 = vmatpush1.msra.mxu0 %v610
      %645 = vmatprep.subr.mxu0 0.0
      %646 = vmatpush1.msra.mxu0 %v609
      %647 = vmatprep.subr.mxu0 0.0
      %648 = vmatpush1.msra.mxu0 %v608
      %649 = vmatprep.subr.mxu0 0.0
      %650 = vmatpush1.msra.mxu0 %v607
      %651 = vmatprep.subr.mxu0 0.0
      %652 = vmatpush1.msra.mxu0 %v606
      %653 = vmatprep.subr.mxu0 0.0
      %654 = vmatpush1.msra.mxu0 %v605
      %655 = vmatprep.subr.mxu0 0.0
      %656 = vmatpush1.msra.mxu0 %v604
      %657 = vmatprep.subr.mxu0 0.0
      %658 = vmatpush1.msra.mxu0 %v603
      %659 = vmatprep.subr.mxu0 0.0
      %660 = vmatpush1.msra.mxu0 %v602
      %661 = vmatprep.subr.mxu0 0.0
      %662 = vmatpush1.msra.mxu0 %v601
      %663 = vmatprep.subr.mxu0 0.0
      %664 = vmatpush1.msra.mxu0 %v600
      %665 = vmatprep.subr.mxu0 0.0
      %666 = vmatpush2.msra.mxu0 %v631
      %667 = vmatprep.subr.mxu0 0.0
      %668 = vmatpush2.msra.mxu0 %v630
      %669 = vmatprep.subr.mxu0 0.0
      %670 = vmatpush2.msra.mxu0 %v629
      %671 = vmatprep.subr.mxu0 0.0
      %672 = vmatpush2.msra.mxu0 %v628
      %673 = vmatprep.subr.mxu0 0.0
      %674 = vmatpush2.msra.mxu0 %v627
      %675 = vmatprep.subr.mxu0 0.0
      %676 = vmatpush2.msra.mxu0 %v626
      %677 = vmatprep.subr.mxu0 0.0
      %678 = vmatpush2.msra.mxu0 %v625
      %679 = vmatprep.subr.mxu0 0.0
      %680 = vmatpush2.msra.mxu0 %v624
      %681 = vmatprep.subr.mxu0 0.0
      %682 = vmatpush2.msra.mxu0 %v623
      %683 = vmatprep.subr.mxu0 0.0
      %684 = vmatpush2.msra.mxu0 %v622
      %685 = vmatprep.subr.mxu0 0.0
      %686 = vmatpush2.msra.mxu0 %v621
      %687 = vmatprep.subr.mxu0 0.0
      %688 = vmatpush2.msra.mxu0 %v620
      %689 = vmatprep.subr.mxu0 0.0
      %690 = vmatpush2.msra.mxu0 %v619
      %691 = vmatprep.subr.mxu0 0.0
      %692 = vmatpush2.msra.mxu0 %v618
      %693 = vmatprep.subr.mxu0 0.0
      %694 = vmatpush2.msra.mxu0 %v617
      %695 = vmatprep.subr.mxu0 0.0
      %696 = vmatpush2.msra.mxu0 %v616
      %697 = vmatprep.mubr.f32.mxu0 %v278
      %698 = vmatmul.mubr.f32.gmra.mxu0 %v277
      %v699 = vpop.f32.mrf.mxu0
      %v700 = vadd.f32 0.0, %v699
      %v701 = vpop.f32.mrf.mxu0
      %702 = vdwg.mxu0
      %v703 = vadd.f32 %v632, %v700
      %704 = vst [vmem:[%s218] sm:$0xff] %v703
      %p705 = scmp.lt.s32.totalorder %s19, 1
      %s706 = scalar_select %p705, %s19, 1
      %p707 = scmp.lt.s32.totalorder %s20, 0
      %s708 = scalar_select %p707, %s20, 0
      %s709 = sadd.s32 %s708, %s706
      %s710 = smul.addr %s709, 8
      %s711 = scalar_lea.vmem %s3, %s710
      // Predicated region
      $region37: #{classification_forward.1} parent=31 // pred_check
        %p712 = pneg %p125
      $region38: #{classification_forward.1} parent=31 // pred_check_branch
        %714 = sbr.rel (%p712) target = $region40
      $region39: #{classification_forward.1} parent=31 // pred_region
        _
      $region40: #{classification_forward.1} parent=31 // pred_fallthru
        _
    $region32: #{classification_forward.1} parent=5 // pred_fallthru
      _
    %p715 = scmp.le.s32.totalorder 2, %s9
    // Predicated region
    $region41: #{classification_forward.1} parent=5 // pred_check
      %p716 = pneg %p715
    $region42: #{classification_forward.1} parent=5 // pred_check_branch
      %718 = sbr.rel (%p716) target = $region44
    $region43: #{classification_forward.1} parent=5 // pred_region
      %s719 = ssub.s32 %s9, 2
      // Predicated region
      $region45: #{classification_forward.1} parent=43 // pred_check
        %p720 = pneg %p131
      $region46: #{classification_forward.1} parent=43 // pred_check_branch
        %722 = sbr.rel (%p720) target = $region48
      $region47: #{classification_forward.1} parent=43 // pred_region
        %p723 = scmp.lt.s32.totalorder %s22, 1
        %s724 = scalar_select %p723, %s22, 1
        %p725 = scmp.lt.s32.totalorder %s23, 0
        %s726 = scalar_select %p725, %s23, 0
        %s727 = sadd.s32 %s726, %s724
        %s728 = smul.addr %s727, 8
        %s729 = scalar_lea.vmem %s3, %s728
      $region48: #{classification_forward.1} parent=43 // pred_fallthru
        _
    $region44: #{classification_forward.1} parent=5 // pred_fallthru
      _
  $region6: #{classification_forward.1} parent=0 // loop_footer
    %s13 = sadd.s32 1, %s9
  $region7: #{classification_forward.1} parent=0 // loop_footer_branch
    %8 = sbr.rel target = $region3
  $region8: #{classification_forward.1} parent=0 // loop_exit
    _

</llo_original>
